<compile_context>
chip_gen: v7x
topology: tpu7x:2x2x1
jax: 0.10.0
libtpu: 0.0.40
codegen_flags: <defaults>
</compile_context>

<pallas_src>
import jax
import jax.numpy as jnp
import numpy as np
from jax.experimental import pallas as pl
from jax.experimental.pallas import tpu as pltpu


# ----------------------------------------------------------------------------
# Fused kernel body: QK^T -> per-head softmax -> (attn @ (V@Wo)) + bias + residual
# ----------------------------------------------------------------------------
def _make_kernel(mxu_dtype):
    def kernel(q_ref, xr_ref, kbt_ref, vp_ref, seg_ref, bo_ref, o_ref):
        # One matmul for all heads: (tile_l, c) x (c, heads*m) -> (tile_l, heads*m)
        dots = jnp.dot(q_ref[0], kbt_ref[0], preferred_element_type=jnp.float32)

        # Per-head softmax with no lane slicing / no VMEM scratch:
        #  - global row max is a valid shift (constant within every head's group)
        #  - per-head denominators + broadcast-back via one tiny block-diagonal matmul
        mx = jnp.max(dots, axis=-1, keepdims=True)
        p = jnp.exp(dots - mx)                                         # f32, <= 1
        denom = jnp.dot(p, seg_ref[...], preferred_element_type=jnp.float32)
        denom = jnp.maximum(denom, 1e-30)                              # full-head underflow guard
        attn = p * pl.reciprocal(denom, approx=True)                   # EUP slot

        # Attention output (Wo already folded into vp per head) + bias + residual.
        out = jnp.dot(attn.astype(mxu_dtype), vp_ref[0],
                      preferred_element_type=jnp.float32)
        o_ref[0] = xr_ref[0] + out + bo_ref[...]

    return kernel


# ----------------------------------------------------------------------------
# Wrapper
# ----------------------------------------------------------------------------
def former2mobile_pallas(x, z, params, heads, *, mxu_dtype=jnp.bfloat16):
    b, c, h, w = x.shape
    _, m, d = z.shape
    L = h * w
    hm = heads * m
    scale = c ** (-0.5)
    f32 = jnp.float32

    # ---- z-side work hoisted out of the kernel (tiny, batch-only dependence) ----
    # torch Linear weight is (out, in).  The torch `.view(b, heads, m, c)` of the
    # (b, m, heads*c) projection is a raw flat reshape -> (b, heads*m, c).
    # Scale is folded in f32 *before* the single bf16 cast (no compounded rounding).
    k_proj = (z @ params["wk"].T + params["bk"]) * scale                 # (b, m, inner)
    kbT = jnp.transpose(k_proj.reshape(b, hm, c), (0, 2, 1))             # (b, c, hm)
    v_proj = (z @ params["wv"].T + params["bv"]).reshape(b, heads, m, c)
    wo3 = params["wo"].T.reshape(heads, c, c)                            # wo3[h, j, i] = wo[i, h*c+j]
    vp = jnp.einsum("bhmj,hji->bhmi", v_proj, wo3).reshape(b, hm, c)     # V @ Wo folded per head
    bo = params["bo"].reshape(1, c).astype(f32)

    # Block-diagonal segment-sum matrix: seg[i, j] = 1 iff i, j belong to same head.
    seg = jnp.asarray(np.kron(np.eye(heads, dtype=np.float32),
                              np.ones((m, m), dtype=np.float32)))        # (hm, hm)

    # Cast grid-invariant MXU operands once, in the wrapper.
    kbT = kbT.astype(mxu_dtype)
    vp = vp.astype(mxu_dtype)

    # ---- x-side views ----
    # q needs transposed data (materialised at mxu_dtype, cast fused into the transpose);
    # x_resid is the raw flat view of x, matching torch's `out.view(b, c, h, w)` residual
    # semantics (intentionally NOT a channel-aligned add).
    q = jnp.transpose(x.reshape(b, c, L), (0, 2, 1)).astype(mxu_dtype)   # (b, L, c)
    x_resid = x.reshape(b, L, c)                                         # free view, f32

    # ---- L tiling: largest divisor of L that is a multiple of 8, capped at 2048 ----
    # (divisor => no ragged blocks; multiple of 8 satisfies the (8,128) sublane rule)
    tile_l = L
    for t in range(min(L, 2048), 7, -1):
        if L % t == 0 and t % 8 == 0:
            tile_l = t
            break
    n_lt = L // tile_l

    itm = jnp.dtype(mxu_dtype).itemsize
    cost = pl.CostEstimate(
        flops=int(2 * b * L * hm * (2 * c + hm)),
        transcendentals=int(2 * b * L * hm),
        bytes_accessed=int(b * L * c * (itm + 4 + 4)          # q + x_resid + out
                           + 2 * b * hm * c * itm             # kbT + vp
                           + hm * hm * 4 + c * 4),            # seg + bias
    )

    kernel = _make_kernel(mxu_dtype)

    out = pl.pallas_call(
        kernel,
        out_shape=jax.ShapeDtypeStruct((b, L, c), f32),
        grid=(b, n_lt),
        in_specs=[
            pl.BlockSpec((1, tile_l, c), lambda i, j: (i, j, 0)),   # q
            pl.BlockSpec((1, tile_l, c), lambda i, j: (i, j, 0)),   # residual (flat view of x)
            pl.BlockSpec((1, c, hm), lambda i, j: (i, 0, 0)),       # K^T (scale folded)
            pl.BlockSpec((1, hm, c), lambda i, j: (i, 0, 0)),       # V @ Wo (per head)
            pl.BlockSpec((hm, hm), lambda i, j: (0, 0)),            # segment-sum matrix
            pl.BlockSpec((1, c), lambda i, j: (0, 0)),              # output bias
        ],
        out_specs=pl.BlockSpec((1, tile_l, c), lambda i, j: (i, j, 0)),
        compiler_params=pltpu.CompilerParams(
            dimension_semantics=("parallel", "parallel")),
        cost_estimate=cost,
    )(q, x_resid, kbT, vp, seg, bo)

    # Exact torch `out.view(b, c, h, w)` semantics (flat reinterpretation; residual
    # was already added on the flat (L, c) buffer inside the kernel).
    return out.reshape(b, c, h, w)


# ----------------------------------------------------------------------------
# Pure-JAX reference (mirrors the PyTorch forward exactly)
# ----------------------------------------------------------------------------
def reference(x, z, params, heads):
    b, c, h, w = x.shape
    m = z.shape[1]
    scale = c ** (-0.5)
    q = jnp.transpose(x.reshape(b, c, h * w), (0, 2, 1))            # (b, L, c)
    k = (z @ params["wk"].T + params["bk"]).reshape(b, heads, m, c)
    v = (z @ params["wv"].T + params["bv"]).reshape(b, heads, m, c)
    dots = jnp.einsum("blc,bhmc->bhlm", q, k) * scale
    attn = jax.nn.softmax(dots, axis=-1)
    out = jnp.einsum("bhlm,bhmc->bhlc", attn, v)
    out = jnp.transpose(out, (0, 2, 1, 3)).reshape(b, h * w, heads * c)
    out = out @ params["wo"].T + params["bo"]
    # TODO(synk): nn.Dropout(p=0.0) is the identity; nothing to implement.
    out = out.reshape(b, c, h, w)
    return x + out


if __name__ == "__main__":
    key = jax.random.PRNGKey(0)
    b, c, h, w = 2, 4, 8, 8          # x: (B, C, H, W)
    m, d, heads = 8, 32, 2           # z: (B, M, D), heads
    inner = heads * c

    ks = jax.random.split(key, 8)
    x = jax.random.normal(ks[0], (b, c, h, w), jnp.float32)
    z = jax.random.normal(ks[1], (b, m, d), jnp.float32)
    params = {
        "wk": jax.random.normal(ks[2], (inner, d), jnp.float32) * 0.1,
        "bk": jax.random.normal(ks[3], (inner,), jnp.float32) * 0.1,
        "wv": jax.random.normal(ks[4], (inner, d), jnp.float32) * 0.1,
        "bv": jax.random.normal(ks[5], (inner,), jnp.float32) * 0.1,
        "wo": jax.random.normal(ks[6], (c, inner), jnp.float32) * 0.1,
        "bo": jax.random.normal(ks[7], (c,), jnp.float32) * 0.1,
    }

    ref = reference(x, z, params, heads)

    # Exact-parity mode (f32 MXU operands; tolerance only for the EUP approximate
    # reciprocal used in the softmax normalisation).
    out_f32 = jax.block_until_ready(
        former2mobile_pallas(x, z, params, heads, mxu_dtype=jnp.float32))
    assert out_f32.shape == (b, c, h, w)
    np.testing.assert_allclose(np.asarray(out_f32), np.asarray(ref),
                               atol=5e-3, rtol=5e-3)

    # Default fast mode (bf16 MXU operands, f32 accumulation / softmax / residual).
    out_fast = jax.block_until_ready(former2mobile_pallas(x, z, params, heads))
    np.testing.assert_allclose(np.asarray(out_fast), np.asarray(ref),
                               atol=3e-2, rtol=3e-2)

    print("KERNEL_OK")
</pallas_src>

<mosaic_0001>
module attributes {stable_mosaic.version = 11 : i64} {
  func.func @kernel(%arg0: i32, %arg1: i32, %arg2: memref<1x64x4xf32, #tpu.memory_space<vmem>>, %arg3: memref<1x64x4xf32, #tpu.memory_space<vmem>>, %arg4: memref<1x4x16xf32, #tpu.memory_space<vmem>>, %arg5: memref<1x16x4xf32, #tpu.memory_space<vmem>>, %arg6: memref<16x16xf32, #tpu.memory_space<vmem>>, %arg7: memref<1x4xf32, #tpu.memory_space<vmem>>, %arg8: memref<1x64x4xf32, #tpu.memory_space<vmem>>) attributes {dimension_semantics = [#tpu.dimension_semantics<parallel>, #tpu.dimension_semantics<parallel>], iteration_bounds = array<i64: 2, 1>, scalar_prefetch = 0 : i64, scratch_operands = 0 : i64, tpu.core_type = #tpu.core_type<tc>, window_params = [{transform_indices = @transform_0, window_bounds = array<i64: 1, 64, 4>}, {transform_indices = @transform_1, window_bounds = array<i64: 1, 64, 4>}, {transform_indices = @transform_2, window_bounds = array<i64: 1, 4, 16>}, {transform_indices = @transform_3, window_bounds = array<i64: 1, 16, 4>}, {pipeline_mode = #tpu.pipeline_mode<synchronous>, transform_indices = @transform_4, window_bounds = array<i64: 16, 16>}, {pipeline_mode = #tpu.pipeline_mode<synchronous>, transform_indices = @transform_5, window_bounds = array<i64: 1, 4>}, {transform_indices = @transform_6, window_bounds = array<i64: 1, 64, 4>}]} {
    %c0 = arith.constant 0 : index
    %c0_0 = arith.constant 0 : index
    %c0_1 = arith.constant 0 : index
    %0 = vector.load %arg2[%c0, %c0_0, %c0_1] : memref<1x64x4xf32, #tpu.memory_space<vmem>>, vector<1x64x4xf32>
    %1 = vector.shape_cast %0 : vector<1x64x4xf32> to vector<64x4xf32>
    %c0_2 = arith.constant 0 : index
    %c0_3 = arith.constant 0 : index
    %c0_4 = arith.constant 0 : index
    %2 = vector.load %arg4[%c0_2, %c0_3, %c0_4] : memref<1x4x16xf32, #tpu.memory_space<vmem>>, vector<1x4x16xf32>
    %3 = vector.shape_cast %2 : vector<1x4x16xf32> to vector<4x16xf32>
    %cst = arith.constant dense<0.000000e+00> : vector<64x16xf32>
    %4 = tpu.matmul %1, %3, %cst {dimension_numbers = #tpu.dot_dimension_numbers<[1], [0], [0], [1], [0, 0, 1, 1], [], []>} : vector<64x4xf32>, vector<4x16xf32>, vector<64x16xf32> -> vector<64x16xf32>
    %cst_5 = arith.constant dense<0xFF800000> : vector<64xf32>
    %5 = vector.multi_reduction <maximumf>, %4, %cst_5 [1] : vector<64x16xf32> to vector<64xf32>
    %6 = vector.shape_cast %5 : vector<64xf32> to vector<64x1xf32>
    %7 = vector.broadcast %6 : vector<64x1xf32> to vector<64x16xf32>
    %8 = arith.subf %4, %7 : vector<64x16xf32>
    %9 = math.exp %8 : vector<64x16xf32>
    %c0_6 = arith.constant 0 : index
    %c0_7 = arith.constant 0 : index
    %10 = vector.load %arg6[%c0_6, %c0_7] : memref<16x16xf32, #tpu.memory_space<vmem>>, vector<16x16xf32>
    %cst_8 = arith.constant dense<0.000000e+00> : vector<64x16xf32>
    %11 = tpu.matmul %9, %10, %cst_8 {dimension_numbers = #tpu.dot_dimension_numbers<[1], [0], [0], [1], [0, 0, 1, 1], [], []>} : vector<64x16xf32>, vector<16x16xf32>, vector<64x16xf32> -> vector<64x16xf32>
    %cst_9 = arith.constant 1.000000e-30 : f32
    %12 = vector.broadcast %cst_9 : f32 to vector<64x16xf32>
    %13 = arith.maximumf %11, %12 : vector<64x16xf32>
    %14 = tpu.reciprocal %13 {approx = true} : vector<64x16xf32> -> vector<64x16xf32>
    %15 = arith.mulf %9, %14 : vector<64x16xf32>
    %c0_10 = arith.constant 0 : index
    %c0_11 = arith.constant 0 : index
    %c0_12 = arith.constant 0 : index
    %16 = vector.load %arg5[%c0_10, %c0_11, %c0_12] : memref<1x16x4xf32, #tpu.memory_space<vmem>>, vector<1x16x4xf32>
    %17 = vector.shape_cast %16 : vector<1x16x4xf32> to vector<16x4xf32>
    %cst_13 = arith.constant dense<0.000000e+00> : vector<64x4xf32>
    %18 = tpu.matmul %15, %17, %cst_13 {dimension_numbers = #tpu.dot_dimension_numbers<[1], [0], [0], [1], [0, 0, 1, 1], [], []>} : vector<64x16xf32>, vector<16x4xf32>, vector<64x4xf32> -> vector<64x4xf32>
    %c0_14 = arith.constant 0 : index
    %c0_15 = arith.constant 0 : index
    %c0_16 = arith.constant 0 : index
    %19 = vector.load %arg3[%c0_14, %c0_15, %c0_16] : memref<1x64x4xf32, #tpu.memory_space<vmem>>, vector<1x64x4xf32>
    %20 = vector.shape_cast %19 : vector<1x64x4xf32> to vector<64x4xf32>
    %21 = arith.addf %20, %18 : vector<64x4xf32>
    %c0_17 = arith.constant 0 : index
    %c0_18 = arith.constant 0 : index
    %22 = vector.load %arg7[%c0_17, %c0_18] : memref<1x4xf32, #tpu.memory_space<vmem>>, vector<1x4xf32>
    %23 = vector.broadcast %22 : vector<1x4xf32> to vector<64x4xf32>
    %24 = arith.addf %21, %23 : vector<64x4xf32>
    %c0_19 = arith.constant 0 : index
    %c0_20 = arith.constant 0 : index
    %c0_21 = arith.constant 0 : index
    %25 = vector.load %arg8[%c0_19, %c0_20, %c0_21] : memref<1x64x4xf32, #tpu.memory_space<vmem>>, vector<1x64x4xf32>
    %26 = vector.shape_cast %25 : vector<1x64x4xf32> to vector<64x4xf32>
    %27 = vector.shape_cast %24 : vector<64x4xf32> to vector<1x64x4xf32>
    tpu.vector_store %arg8[%c0_19, %c0_20, %c0_21], %27 {strides = array<i32>} : memref<1x64x4xf32, #tpu.memory_space<vmem>>, vector<1x64x4xf32>,
    return
  }
  func.func @transform_0(%arg0: i32, %arg1: i32) -> (i32, i32, i32) {
    %c0_i32 = arith.constant 0 : i32
    %c0_i32_0 = arith.constant 0 : i32
    return %arg0, %arg1, %c0_i32 : i32, i32, i32
  }
  func.func @transform_1(%arg0: i32, %arg1: i32) -> (i32, i32, i32) {
    %c0_i32 = arith.constant 0 : i32
    %c0_i32_0 = arith.constant 0 : i32
    return %arg0, %arg1, %c0_i32 : i32, i32, i32
  }
  func.func @transform_2(%arg0: i32, %arg1: i32) -> (i32, i32, i32) {
    %c0_i32 = arith.constant 0 : i32
    %c0_i32_0 = arith.constant 0 : i32
    %c0_i32_1 = arith.constant 0 : i32
    return %arg0, %c0_i32, %c0_i32_0 : i32, i32, i32
  }
  func.func @transform_3(%arg0: i32, %arg1: i32) -> (i32, i32, i32) {
    %c0_i32 = arith.constant 0 : i32
    %c0_i32_0 = arith.constant 0 : i32
    %c0_i32_1 = arith.constant 0 : i32
    return %arg0, %c0_i32, %c0_i32_0 : i32, i32, i32
  }
  func.func @transform_4(%arg0: i32, %arg1: i32) -> (i32, i32) {
    %c0_i32 = arith.constant 0 : i32
    %c0_i32_0 = arith.constant 0 : i32
    %c0_i32_1 = arith.constant 0 : i32
    return %c0_i32, %c0_i32_0 : i32, i32
  }
  func.func @transform_5(%arg0: i32, %arg1: i32) -> (i32, i32) {
    %c0_i32 = arith.constant 0 : i32
    %c0_i32_0 = arith.constant 0 : i32
    %c0_i32_1 = arith.constant 0 : i32
    return %c0_i32, %c0_i32_0 : i32, i32
  }
  func.func @transform_6(%arg0: i32, %arg1: i32) -> (i32, i32, i32) {
    %c0_i32 = arith.constant 0 : i32
    %c0_i32_0 = arith.constant 0 : i32
    return %arg0, %arg1, %c0_i32 : i32, i32, i32
  }
}

</mosaic_0001>

<llo_original>
// kernel: tpu_custom_call.1
$region0: #{tpu_custom_call.1}
  #allocation0 [shape = 'u32[]', space=smem, size = 0x4, offset = 0x4, fixed_abs, tag = 'smem constant byte address 0x4 - core index']
  #allocation1 [shape = 'u32[144,128]{1,0:T(1,128)}', space=vmem, size = 0x12000, scoped, tag = 'internal scratch']
  %s0 = inlined_call_operand.vmem [shape: f32[2,64,4], index: 0, kind: input, shape index: {}]
  %s1 = inlined_call_operand.vmem [shape: f32[2,64,4], index: 1, kind: input, shape index: {}]
  %s2 = inlined_call_operand.vmem [shape: f32[2,4,16], index: 2, kind: input, shape index: {}]
  %s3 = inlined_call_operand.vmem [shape: f32[2,16,4], index: 3, kind: input, shape index: {}]
  %s4 = inlined_call_operand.vmem [shape: f32[16,16], index: 4, kind: input, shape index: {}]
  %s5 = inlined_call_operand.vmem [shape: f32[1,4], index: 5, kind: input, shape index: {}]
  %s6 = inlined_call_operand.vmem [shape: f32[2,64,4], index: 6, kind: output, shape index: {}]
  %s7 = sld [smem:[#allocation0]]
  $region57: #{tpu_custom_call.1} parent=0
    _
  %s9 = ssub.s32 1, %s7
  %s10 = scalar_select 0, %s9, %s7
  loop: start=0, step=1, limit=4
  $region2: #{tpu_custom_call.1} parent=0 // loop_pre_header
    _
  $region3: #{tpu_custom_call.1} parent=0 // loop_header
    %s12 = sphi 0, %s16
    %p13 = scmp.ge.s32.totalorder %s12, 4
    %s19 = sphi 0, %s31
    %s20 = sphi 0, %s27
    %s21 = sphi 0, %s19
    %s22 = sphi 0, %s20
    %s23 = sphi 0, %s21
    %s24 = sphi 0, %s22
    %s36 = sphi 0, %s38
    %s39 = sphi 0, %s36
    %s40 = sphi 0, %s39
    %s56 = sphi 0, %s40
    %s64 = sphi 0, %s66
    %s67 = sphi 0, %s64
    %s68 = sphi 0, %s67
    %s84 = sphi 0, %s68
    %s90 = sphi 0, %s92
    %s93 = sphi 0, %s90
    %s94 = sphi 0, %s93
    %s110 = sphi 0, %s94
    %s116 = sphi 0, %s118
    %s119 = sphi 0, %s116
    %s120 = sphi 0, %s119
    %s136 = sphi 0, %s120
    %s140 = sphi 0, %s140
    %s142 = sphi 0, %s140
    %s143 = sphi 0, %s142
    %s157 = sphi 0, %s143
    %s161 = sphi 0, %s161
    %s163 = sphi 0, %s161
    %s164 = sphi 0, %s163
    %s178 = sphi 0, %s164
    %s186 = sphi 0, %s188
    %s189 = sphi 0, %s186
    %s190 = sphi 0, %s189
    %s206 = sphi 0, %s190
  $region4: #{tpu_custom_call.1} parent=0 // loop_header_branch
    %15 = sbr.rel (%p13) target = $region8
  $region5: #{tpu_custom_call.1} parent=0 // loop_body
    %s17 = ssub.s32 %s12, 1
    %s18 = ssub.s32 %s12, 2
    %s25 = sadd.s32 1, %s20
    %p26 = scmp.ge.s32.totalorder %s25, 1
    %s27 = scalar_select %p26, 0, %s25
    %s28 = sadd.s32 1, %s19
    %s29 = scalar_select %p26, %s28, %s19
    %p30 = scmp.ge.s32.totalorder %s29, 2
    %s31 = scalar_select %p30, 0, %s29
    %s32 = ssub.s32 %s19, %s31
    %s33 = ssub.s32 %s20, %s27
    %s34 = sor.u32 %s32, %s33
    %p35 = scmp.eq.s32.totalorder %s34, 0
    %s37 = sadd.s32 %s36, 1
    %s38 = scalar_select %p35, %s36, %s37
    %p41 = pneg %p35
    %p42 = scmp.eq.s32.totalorder %s12, 1
    %p43 = por %p41, %p42
    %p44 = scmp.ne.s32.totalorder %s36, %s39
    %p45 = scmp.eq.s32.totalorder %s12, 0
    %p46 = por %p44, %p45
    %p47 = scmp.ne.s32.totalorder %s36, %s39
    %p48 = scmp.eq.s32.totalorder %s17, 1
    %p49 = por %p47, %p48
    %p50 = scmp.ne.s32.totalorder %s39, %s40
    %p51 = scmp.eq.s32.totalorder %s17, 0
    %p52 = por %p50, %p51
    %p53 = scmp.ne.s32.totalorder %s39, %s40
    %p54 = scmp.eq.s32.totalorder %s18, 1
    %p55 = por %p53, %p54
    %p57 = scmp.ne.s32.totalorder %s40, %s56
    %p58 = scmp.eq.s32.totalorder %s18, 0
    %p59 = por %p57, %p58
    %s60 = ssub.s32 %s19, %s31
    %s61 = ssub.s32 %s20, %s27
    %s62 = sor.u32 %s60, %s61
    %p63 = scmp.eq.s32.totalorder %s62, 0
    %s65 = sadd.s32 %s64, 1
    %s66 = scalar_select %p63, %s64, %s65
    %p69 = pneg %p63
    %p70 = scmp.eq.s32.totalorder %s12, 1
    %p71 = por %p69, %p70
    %p72 = scmp.ne.s32.totalorder %s64, %s67
    %p73 = scmp.eq.s32.totalorder %s12, 0
    %p74 = por %p72, %p73
    %p75 = scmp.ne.s32.totalorder %s64, %s67
    %p76 = scmp.eq.s32.totalorder %s17, 1
    %p77 = por %p75, %p76
    %p78 = scmp.ne.s32.totalorder %s67, %s68
    %p79 = scmp.eq.s32.totalorder %s17, 0
    %p80 = por %p78, %p79
    %p81 = scmp.ne.s32.totalorder %s67, %s68
    %p82 = scmp.eq.s32.totalorder %s18, 1
    %p83 = por %p81, %p82
    %p85 = scmp.ne.s32.totalorder %s68, %s84
    %p86 = scmp.eq.s32.totalorder %s18, 0
    %p87 = por %p85, %p86
    %s88 = ssub.s32 %s19, %s31
    %p89 = scmp.eq.s32.totalorder %s88, 0
    %s91 = sadd.s32 %s90, 1
    %s92 = scalar_select %p89, %s90, %s91
    %p95 = pneg %p89
    %p96 = scmp.eq.s32.totalorder %s12, 1
    %p97 = por %p95, %p96
    %p98 = scmp.ne.s32.totalorder %s90, %s93
    %p99 = scmp.eq.s32.totalorder %s12, 0
    %p100 = por %p98, %p99
    %p101 = scmp.ne.s32.totalorder %s90, %s93
    %p102 = scmp.eq.s32.totalorder %s17, 1
    %p103 = por %p101, %p102
    %p104 = scmp.ne.s32.totalorder %s93, %s94
    %p105 = scmp.eq.s32.totalorder %s17, 0
    %p106 = por %p104, %p105
    %p107 = scmp.ne.s32.totalorder %s93, %s94
    %p108 = scmp.eq.s32.totalorder %s18, 1
    %p109 = por %p107, %p108
    %p111 = scmp.ne.s32.totalorder %s94, %s110
    %p112 = scmp.eq.s32.totalorder %s18, 0
    %p113 = por %p111, %p112
    %s114 = ssub.s32 %s19, %s31
    %p115 = scmp.eq.s32.totalorder %s114, 0
    %s117 = sadd.s32 %s116, 1
    %s118 = scalar_select %p115, %s116, %s117
    %p121 = pneg %p115
    %p122 = scmp.eq.s32.totalorder %s12, 1
    %p123 = por %p121, %p122
    %p124 = scmp.ne.s32.totalorder %s116, %s119
    %p125 = scmp.eq.s32.totalorder %s12, 0
    %p126 = por %p124, %p125
    %p127 = scmp.ne.s32.totalorder %s116, %s119
    %p128 = scmp.eq.s32.totalorder %s17, 1
    %p129 = por %p127, %p128
    %p130 = scmp.ne.s32.totalorder %s119, %s120
    %p131 = scmp.eq.s32.totalorder %s17, 0
    %p132 = por %p130, %p131
    %p133 = scmp.ne.s32.totalorder %s119, %s120
    %p134 = scmp.eq.s32.totalorder %s18, 1
    %p135 = por %p133, %p134
    %p137 = scmp.ne.s32.totalorder %s120, %s136
    %p138 = scmp.eq.s32.totalorder %s18, 0
    %p139 = por %p137, %p138
    %s141 = sadd.s32 %s140, 1
    %p144 = scmp.eq.s32.totalorder %s12, 1
    %p145 = scmp.ne.s32.totalorder %s140, %s142
    %p146 = scmp.eq.s32.totalorder %s12, 0
    %p147 = por %p145, %p146
    %p148 = scmp.ne.s32.totalorder %s140, %s142
    %p149 = scmp.eq.s32.totalorder %s17, 1
    %p150 = por %p148, %p149
    %p151 = scmp.ne.s32.totalorder %s142, %s143
    %p152 = scmp.eq.s32.totalorder %s17, 0
    %p153 = por %p151, %p152
    %p154 = scmp.ne.s32.totalorder %s142, %s143
    %p155 = scmp.eq.s32.totalorder %s18, 1
    %p156 = por %p154, %p155
    %p158 = scmp.ne.s32.totalorder %s143, %s157
    %p159 = scmp.eq.s32.totalorder %s18, 0
    %p160 = por %p158, %p159
    %s162 = sadd.s32 %s161, 1
    %p165 = scmp.eq.s32.totalorder %s12, 1
    %p166 = scmp.ne.s32.totalorder %s161, %s163
    %p167 = scmp.eq.s32.totalorder %s12, 0
    %p168 = por %p166, %p167
    %p169 = scmp.ne.s32.totalorder %s161, %s163
    %p170 = scmp.eq.s32.totalorder %s17, 1
    %p171 = por %p169, %p170
    %p172 = scmp.ne.s32.totalorder %s163, %s164
    %p173 = scmp.eq.s32.totalorder %s17, 0
    %p174 = por %p172, %p173
    %p175 = scmp.ne.s32.totalorder %s163, %s164
    %p176 = scmp.eq.s32.totalorder %s18, 1
    %p177 = por %p175, %p176
    %p179 = scmp.ne.s32.totalorder %s164, %s178
    %p180 = scmp.eq.s32.totalorder %s18, 0
    %p181 = por %p179, %p180
    %s182 = ssub.s32 %s19, %s31
    %s183 = ssub.s32 %s20, %s27
    %s184 = sor.u32 %s182, %s183
    %p185 = scmp.eq.s32.totalorder %s184, 0
    %s187 = sadd.s32 %s186, 1
    %s188 = scalar_select %p185, %s186, %s187
    %p191 = pneg %p185
    %p192 = scmp.eq.s32.totalorder %s12, 1
    %p193 = por %p191, %p192
    %p194 = scmp.ne.s32.totalorder %s186, %s189
    %p195 = scmp.eq.s32.totalorder %s12, 0
    %p196 = por %p194, %p195
    %p197 = scmp.ne.s32.totalorder %s186, %s189
    %p198 = scmp.eq.s32.totalorder %s17, 1
    %p199 = por %p197, %p198
    %p200 = scmp.ne.s32.totalorder %s189, %s190
    %p201 = scmp.eq.s32.totalorder %s17, 0
    %p202 = por %p200, %p201
    %p203 = scmp.ne.s32.totalorder %s189, %s190
    %p204 = scmp.eq.s32.totalorder %s18, 1
    %p205 = por %p203, %p204
    %p207 = scmp.ne.s32.totalorder %s190, %s206
    %p208 = scmp.eq.s32.totalorder %s18, 0
    %p209 = por %p207, %p208
    %p210 = scmp.le.s32.totalorder 1, %s12
    %p211 = scmp.lt.s32.totalorder %s12, 3
    %p212 = pnand %p210, %p211
    %p213 = pneg %p212
    // Predicated region
    $region9: #{tpu_custom_call.1} parent=5 // pred_check
      _
    $region10: #{tpu_custom_call.1} parent=5 // pred_check_branch
      %215 = sbr.rel (%p212) target = $region12
    $region11: #{tpu_custom_call.1} parent=5 // pred_region
      %s216 = ssub.s32 %s12, 1
      // Predicated region
      $region13: #{tpu_custom_call.1} parent=11 // pred_check
        %p217 = pneg %p153
      $region14: #{tpu_custom_call.1} parent=11 // pred_check_branch
        %219 = sbr.rel (%p217) target = $region16
      $region15: #{tpu_custom_call.1} parent=11 // pred_region
        _
      $region16: #{tpu_custom_call.1} parent=11 // pred_fallthru
        _
      // Predicated region
      $region17: #{tpu_custom_call.1} parent=11 // pred_check
        %p220 = pneg %p174
      $region18: #{tpu_custom_call.1} parent=11 // pred_check_branch
        %222 = sbr.rel (%p220) target = $region20
      $region19: #{tpu_custom_call.1} parent=11 // pred_region
        _
      $region20: #{tpu_custom_call.1} parent=11 // pred_fallthru
        _
    $region12: #{tpu_custom_call.1} parent=5 // pred_fallthru
      _
    %p223 = scmp.lt.s32.totalorder %s12, 2
    // Predicated region
    $region21: #{tpu_custom_call.1} parent=5 // pred_check
      %p224 = pneg %p223
    $region22: #{tpu_custom_call.1} parent=5 // pred_check_branch
      %226 = sbr.rel (%p224) target = $region24
    $region23: #{tpu_custom_call.1} parent=5 // pred_region
      // Predicated region
      $region25: #{tpu_custom_call.1} parent=23 // pred_check
        %p227 = pneg %p46
      $region26: #{tpu_custom_call.1} parent=23 // pred_check_branch
        %229 = sbr.rel (%p227) target = $region28
      $region27: #{tpu_custom_call.1} parent=23 // pred_region
        %s230 = smul.u32 8, %s20
        %p231 = scmp.lt.s32.totalorder %s19, 1
        %s232 = scalar_select %p231, %s19, 1
        %p233 = scmp.lt.s32.totalorder %s230, 7
        %s234 = scalar_select %p233, %s230, 7
        %s235 = smul.addr %s232, 8
        %s236 = sadd.s32 %s234, %s235
        %s237 = smul.addr %s236, 8
        %s238 = scalar_lea.vmem %s0, %s237
        %s239 = smul.u32 8, %s20
      $region28: #{tpu_custom_call.1} parent=23 // pred_fallthru
        _
      // Predicated region
      $region29: #{tpu_custom_call.1} parent=23 // pred_check
        %p240 = pneg %p74
      $region30: #{tpu_custom_call.1} parent=23 // pred_check_branch
        %242 = sbr.rel (%p240) target = $region32
      $region31: #{tpu_custom_call.1} parent=23 // pred_region
        %s243 = smul.u32 8, %s20
        %p244 = scmp.lt.s32.totalorder %s19, 1
        %s245 = scalar_select %p244, %s19, 1
        %p246 = scmp.lt.s32.totalorder %s243, 7
        %s247 = scalar_select %p246, %s243, 7
        %s248 = smul.addr %s245, 8
        %s249 = sadd.s32 %s247, %s248
        %s250 = smul.addr %s249, 8
        %s251 = scalar_lea.vmem %s1, %s250
        %s252 = smul.u32 8, %s20
      $region32: #{tpu_custom_call.1} parent=23 // pred_fallthru
        _
      // Predicated region
      $region33: #{tpu_custom_call.1} parent=23 // pred_check
        %p253 = pneg %p100
      $region34: #{tpu_custom_call.1} parent=23 // pred_check_branch
        %255 = sbr.rel (%p253) target = $region36
      $region35: #{tpu_custom_call.1} parent=23 // pred_region
        %p256 = scmp.lt.s32.totalorder %s19, 1
        %s257 = scalar_select %p256, %s19, 1
        %s258 = smul.addr %s257, 4
        %s259 = scalar_lea.vmem %s2, %s258
      $region36: #{tpu_custom_call.1} parent=23 // pred_fallthru
        _
      // Predicated region
      $region37: #{tpu_custom_call.1} parent=23 // pred_check
        %p260 = pneg %p126
      $region38: #{tpu_custom_call.1} parent=23 // pred_check_branch
        %262 = sbr.rel (%p260) target = $region40
      $region39: #{tpu_custom_call.1} parent=23 // pred_region
        %p263 = scmp.lt.s32.totalorder %s19, 1
        %s264 = scalar_select %p263, %s19, 1
        %s265 = smul.addr %s264, 2
        %s266 = smul.addr %s265, 8
        %s267 = scalar_lea.vmem %s3, %s266
      $region40: #{tpu_custom_call.1} parent=23 // pred_fallthru
        _
    $region24: #{tpu_custom_call.1} parent=5 // pred_fallthru
      _
    %p268 = scmp.le.s32.totalorder 1, %s12
    %p269 = scmp.lt.s32.totalorder %s12, 3
    %p270 = pnand %p268, %p269
    %p271 = pneg %p270
    // Predicated region
    $region41: #{tpu_custom_call.1} parent=5 // pred_check
      _
    $region42: #{tpu_custom_call.1} parent=5 // pred_check_branch
      %273 = sbr.rel (%p270) target = $region44
    $region43: #{tpu_custom_call.1} parent=5 // pred_region
      %s274 = ssub.s32 %s12, 1
      %s275 = smul.u32 8, %s22
      %p276 = scmp.lt.s32.totalorder %s21, 1
      %s277 = scalar_select %p276, %s21, 1
      %p278 = scmp.lt.s32.totalorder %s275, 7
      %s279 = scalar_select %p278, %s275, 7
      %s280 = smul.addr %s277, 8
      %s281 = sadd.s32 %s279, %s280
      %s282 = smul.addr %s281, 8
      %s283 = scalar_lea.vmem %s0, %s282
      %p284 = pneg %p52
      %p285 = pneg %p49
      %s286 = smul.u32 8, %s22
      %p287 = scmp.lt.s32.totalorder %s21, 1
      %s288 = scalar_select %p287, %s21, 1
      %p289 = scmp.lt.s32.totalorder %s286, 7
      %s290 = scalar_select %p289, %s286, 7
      %s291 = smul.addr %s288, 8
      %s292 = sadd.s32 %s290, %s291
      %s293 = smul.addr %s292, 8
      %s294 = scalar_lea.vmem %s1, %s293
      %p295 = pneg %p80
      %p296 = pneg %p77
      %p297 = scmp.lt.s32.totalorder %s21, 1
      %s298 = scalar_select %p297, %s21, 1
      %s299 = smul.addr %s298, 4
      %s300 = scalar_lea.vmem %s2, %s299
      %p301 = pneg %p106
      %p302 = pneg %p103
      %p303 = scmp.lt.s32.totalorder %s21, 1
      %s304 = scalar_select %p303, %s21, 1
      %s305 = smul.addr %s304, 2
      %s306 = smul.addr %s305, 8
      %s307 = scalar_lea.vmem %s3, %s306
      %p308 = pneg %p132
      %p309 = pneg %p129
      %p310 = pneg %p153
      %p311 = pneg %p150
      %p312 = pneg %p174
      %p313 = pneg %p171
      %p314 = pneg %p202
      %p315 = pneg %p199
      %s316 = smul.u32 8, %s22
      %p317 = scmp.lt.s32.totalorder %s21, 1
      %s318 = scalar_select %p317, %s21, 1
      %p319 = scmp.lt.s32.totalorder %s316, 7
      %s320 = scalar_select %p319, %s316, 7
      %s321 = smul.addr %s318, 8
      %s322 = sadd.s32 %s320, %s321
      %s323 = smul.addr %s322, 8
      %s324 = scalar_lea.vmem %s6, %s323
      %s325 = smul.u32 8, %s22
      %p326 = scmp.lt.s32.totalorder %s21, 1
      %s327 = scalar_select %p326, %s21, 1
      %p328 = scmp.lt.s32.totalorder %s325, 7
      %s329 = scalar_select %p328, %s325, 7
      %s330 = smul.addr %s327, 8
      %s331 = sadd.s32 %s329, %s330
      %s332 = smul.addr %s331, 8
      %s333 = scalar_lea.vmem %s0, %s332
      %s334 = smul.u32 8, %s22
      %s335 = smul.u32 8, %s22
      %p336 = scmp.lt.s32.totalorder %s21, 1
      %s337 = scalar_select %p336, %s21, 1
      %p338 = scmp.lt.s32.totalorder %s335, 7
      %s339 = scalar_select %p338, %s335, 7
      %s340 = smul.addr %s337, 8
      %s341 = sadd.s32 %s339, %s340
      %s342 = smul.addr %s341, 8
      %s343 = scalar_lea.vmem %s1, %s342
      %s344 = smul.u32 8, %s22
      %p345 = scmp.lt.s32.totalorder %s21, 1
      %s346 = scalar_select %p345, %s21, 1
      %s347 = smul.addr %s346, 4
      %s348 = scalar_lea.vmem %s2, %s347
      %p349 = scmp.lt.s32.totalorder %s21, 1
      %s350 = scalar_select %p349, %s21, 1
      %s351 = smul.addr %s350, 2
      %s352 = smul.addr %s351, 8
      %s353 = scalar_lea.vmem %s3, %s352
      %s354 = smul.u32 8, %s22
      %p355 = scmp.lt.s32.totalorder %s21, 1
      %s356 = scalar_select %p355, %s21, 1
      %p357 = scmp.lt.s32.totalorder %s354, 7
      %s358 = scalar_select %p357, %s354, 7
      %s359 = smul.addr %s356, 8
      %s360 = sadd.s32 %s358, %s359
      %s361 = smul.addr %s360, 8
      %s362 = scalar_lea.vmem %s6, %s361
      %s363 = smul.u32 8, %s22
      %v364 = vld [vmem:[%s333] sm:$0xff]
      %v365 = vld [vmem:[%s333 + $0x8] sm:$0xff]
      %v366 = vld [vmem:[%s333 + $0x10] sm:$0xff]
      %v367 = vld [vmem:[%s333 + $0x18] sm:$0xff]
      %v368 = vld [vmem:[%s333 + $0x20] sm:$0xff]
      %v369 = vld [vmem:[%s333 + $0x28] sm:$0xff]
      %v370 = vld [vmem:[%s333 + $0x30] sm:$0xff]
      %v371 = vld [vmem:[%s333 + $0x38] sm:$0xff]
      %v372 = vld [vmem:[%s348] sm:$0xf]
      %vm373 = vcmask 31744
      %v375 = vsel %vm373, %v364, 0
      %v378 = vsel %vm373, %v365, 0
      %v381 = vsel %vm373, %v366, 0
      %v384 = vsel %vm373, %v367, 0
      %v387 = vsel %vm373, %v368, 0
      %v390 = vsel %vm373, %v369, 0
      %v393 = vsel %vm373, %v370, 0
      %v396 = vsel %vm373, %v371, 0
      %vm398 = vcmask 1043456
      %v400 = vsel %vm398, %v372, 0
      %402 = vmatprep.subr.mxu0 0.0
      %403 = vmatpush1.msra.mxu0 %v400
      %404 = vmatprep.subr.mxu0 0.0
      %405 = vmatpush1.msra.mxu0 0.0
      %406 = vmatprep.subr.mxu0 0.0
      %407 = vmatpush1.msra.mxu0 0.0
      %408 = vmatprep.subr.mxu0 0.0
      %409 = vmatpush1.msra.mxu0 0.0
      %410 = vmatprep.subr.mxu0 0.0
      %411 = vmatpush1.msra.mxu0 0.0
      %412 = vmatprep.subr.mxu0 0.0
      %413 = vmatpush1.msra.mxu0 0.0
      %414 = vmatprep.subr.mxu0 0.0
      %415 = vmatpush1.msra.mxu0 0.0
      %416 = vmatprep.subr.mxu0 0.0
      %417 = vmatpush1.msra.mxu0 0.0
      %418 = vmatprep.subr.mxu0 0.0
      %419 = vmatpush1.msra.mxu0 0.0
      %420 = vmatprep.subr.mxu0 0.0
      %421 = vmatpush1.msra.mxu0 0.0
      %422 = vmatprep.subr.mxu0 0.0
      %423 = vmatpush1.msra.mxu0 0.0
      %424 = vmatprep.subr.mxu0 0.0
      %425 = vmatpush1.msra.mxu0 0.0
      %426 = vmatprep.subr.mxu0 0.0
      %427 = vmatpush1.msra.mxu0 0.0
      %428 = vmatprep.subr.mxu0 0.0
      %429 = vmatpush1.msra.mxu0 0.0
      %430 = vmatprep.subr.mxu0 0.0
      %431 = vmatpush1.msra.mxu0 0.0
      %432 = vmatprep.subr.mxu0 0.0
      %433 = vmatpush1.msra.mxu0 0.0
      %434 = vmatprep.subr.mxu0 0.0
      %435 = vmatpush1.msra.mxu0 0.0
      %436 = vmatprep.subr.mxu0 0.0
      %437 = vmatpush1.msra.mxu0 0.0
      %438 = vmatprep.subr.mxu0 0.0
      %439 = vmatpush1.msra.mxu0 0.0
      %440 = vmatprep.subr.mxu0 0.0
      %441 = vmatpush1.msra.mxu0 0.0
      %442 = vmatprep.subr.mxu0 0.0
      %443 = vmatpush1.msra.mxu0 0.0
      %444 = vmatprep.subr.mxu0 0.0
      %445 = vmatpush1.msra.mxu0 0.0
      %446 = vmatprep.subr.mxu0 0.0
      %447 = vmatpush1.msra.mxu0 0.0
      %448 = vmatprep.subr.mxu0 0.0
      %449 = vmatpush1.msra.mxu0 0.0
      %450 = vmatprep.subr.mxu0 0.0
      %451 = vmatpush1.msra.mxu0 0.0
      %452 = vmatprep.subr.mxu0 0.0
      %453 = vmatpush1.msra.mxu0 0.0
      %454 = vmatprep.subr.mxu0 0.0
      %455 = vmatpush1.msra.mxu0 0.0
      %456 = vmatprep.subr.mxu0 0.0
      %457 = vmatpush1.msra.mxu0 0.0
      %458 = vmatprep.subr.mxu0 0.0
      %459 = vmatpush1.msra.mxu0 0.0
      %460 = vmatprep.subr.mxu0 0.0
      %461 = vmatpush1.msra.mxu0 0.0
      %462 = vmatprep.subr.mxu0 0.0
      %463 = vmatpush1.msra.mxu0 0.0
      %464 = vmatprep.subr.mxu0 0.0
      %465 = vmatpush1.msra.mxu0 0.0
      %466 = vmatprep.mubr.f32.mxu0 0.0
      %467 = vmatmul.mubr.f32.gmra.mrb[0].mxu0 %v375
      %v468 = vpop.f32.mrb[0].mxu0
      %v469 = vadd.f32 0.0, %v468
      %v470 = vpop.f32.mrb[0].mxu0
      %471 = vmatprep.mubr.f32.mxu0 0.0
      %472 = vmatmul.mubr.f32.gmra.mrb[0].mxu0 %v378
      %v473 = vpop.f32.mrb[0].mxu0
      %v474 = vadd.f32 0.0, %v473
      %v475 = vpop.f32.mrb[0].mxu0
      %476 = vmatprep.mubr.f32.mxu0 0.0
      %477 = vmatmul.mubr.f32.gmra.mrb[0].mxu0 %v381
      %v478 = vpop.f32.mrb[0].mxu0
      %v479 = vadd.f32 0.0, %v478
      %v480 = vpop.f32.mrb[0].mxu0
      %481 = vmatprep.mubr.f32.mxu0 0.0
      %482 = vmatmul.mubr.f32.gmra.mrb[0].mxu0 %v384
      %v483 = vpop.f32.mrb[0].mxu0
      %v484 = vadd.f32 0.0, %v483
      %v485 = vpop.f32.mrb[0].mxu0
      %486 = vmatprep.mubr.f32.mxu0 0.0
      %487 = vmatmul.mubr.f32.gmra.mrb[0].mxu0 %v387
      %v488 = vpop.f32.mrb[0].mxu0
      %v489 = vadd.f32 0.0, %v488
      %v490 = vpop.f32.mrb[0].mxu0
      %491 = vmatprep.mubr.f32.mxu0 0.0
      %492 = vmatmul.mubr.f32.gmra.mrb[0].mxu0 %v390
      %v493 = vpop.f32.mrb[0].mxu0
      %v494 = vadd.f32 0.0, %v493
      %v495 = vpop.f32.mrb[0].mxu0
      %496 = vmatprep.mubr.f32.mxu0 0.0
      %497 = vmatmul.mubr.f32.gmra.mrb[0].mxu0 %v393
      %v498 = vpop.f32.mrb[0].mxu0
      %v499 = vadd.f32 0.0, %v498
      %v500 = vpop.f32.mrb[0].mxu0
      %501 = vmatprep.mubr.f32.mxu0 0.0
      %502 = vmatmul.mubr.f32.gmra.mrb[0].mxu0 %v396
      %v503 = vpop.f32.mrb[0].mxu0
      %v504 = vadd.f32 0.0, %v503
      %v505 = vpop.f32.mrb[0].mxu0
      %506 = vdwg.mxu0
      %vm507 = vcmask 130048
      %v508 = vsel %vm507, %v469, -inf
      %509 = vmax.xlane.f32.xlu0 %v508
      %v510 = vpop.xlane.xlu0 %509
      %v511 = vsel %vm507, %v474, -inf
      %512 = vmax.xlane.f32.xlu0 %v511
      %v513 = vpop.xlane.xlu0 %512
      %v514 = vsel %vm507, %v479, -inf
      %515 = vmax.xlane.f32.xlu0 %v514
      %v516 = vpop.xlane.xlu0 %515
      %v517 = vsel %vm507, %v484, -inf
      %518 = vmax.xlane.f32.xlu0 %v517
      %v519 = vpop.xlane.xlu0 %518
      %v520 = vsel %vm507, %v489, -inf
      %521 = vmax.xlane.f32.xlu0 %v520
      %v522 = vpop.xlane.xlu0 %521
      %v523 = vsel %vm507, %v494, -inf
      %524 = vmax.xlane.f32.xlu0 %v523
      %v525 = vpop.xlane.xlu0 %524
      %v526 = vsel %vm507, %v499, -inf
      %527 = vmax.xlane.f32.xlu0 %v526
      %v528 = vpop.xlane.xlu0 %527
      %v529 = vsel %vm507, %v504, -inf
      %530 = vmax.xlane.f32.xlu0 %v529
      %v531 = vpop.xlane.xlu0 %530
      %v532 = vsub.f32 %v469, %v510
      %v533 = vsub.f32 %v474, %v513
      %v534 = vsub.f32 %v479, %v516
      %v535 = vsub.f32 %v484, %v519
      %v536 = vsub.f32 %v489, %v522
      %v537 = vsub.f32 %v494, %v525
      %v538 = vsub.f32 %v499, %v528
      %v539 = vsub.f32 %v504, %v531
      %v540 = vmul.f32 %v532, 1.442695
      %v541 = vpow.pop %v540
      %v542 = vmul.f32 %v533, 1.442695
      %v543 = vpow.pop %v542
      %v544 = vmul.f32 %v534, 1.442695
      %v545 = vpow.pop %v544
      %v546 = vmul.f32 %v535, 1.442695
      %v547 = vpow.pop %v546
      %v548 = vmul.f32 %v536, 1.442695
      %v549 = vpow.pop %v548
      %v550 = vmul.f32 %v537, 1.442695
      %v551 = vpow.pop %v550
      %v552 = vmul.f32 %v538, 1.442695
      %v553 = vpow.pop %v552
      %v554 = vmul.f32 %v539, 1.442695
      %v555 = vpow.pop %v554
      %v556 = vld [vmem:[%s4] sm:$0xff]
      %v557 = vld [vmem:[%s4 + $0x8] sm:$0xff]
      %v559 = vsel %vm507, %v541, 0
      %v562 = vsel %vm507, %v543, 0
      %v565 = vsel %vm507, %v545, 0
      %v568 = vsel %vm507, %v547, 0
      %v571 = vsel %vm507, %v549, 0
      %v574 = vsel %vm507, %v551, 0
      %v577 = vsel %vm507, %v553, 0
      %v580 = vsel %vm507, %v555, 0
      %582 = vmatprep.subr.mxu0 0.0
      %583 = vmatpush1.msra.mxu0 %v556
      %584 = vmatprep.subr.mxu0 0.0
      %585 = vmatpush1.msra.mxu0 %v557
      %586 = vmatprep.subr.mxu0 0.0
      %587 = vmatpush1.msra.mxu0 0.0
      %588 = vmatprep.subr.mxu0 0.0
      %589 = vmatpush1.msra.mxu0 0.0
      %590 = vmatprep.subr.mxu0 0.0
      %591 = vmatpush1.msra.mxu0 0.0
      %592 = vmatprep.subr.mxu0 0.0
      %593 = vmatpush1.msra.mxu0 0.0
      %594 = vmatprep.subr.mxu0 0.0
      %595 = vmatpush1.msra.mxu0 0.0
      %596 = vmatprep.subr.mxu0 0.0
      %597 = vmatpush1.msra.mxu0 0.0
      %598 = vmatprep.subr.mxu0 0.0
      %599 = vmatpush1.msra.mxu0 0.0
      %600 = vmatprep.subr.mxu0 0.0
      %601 = vmatpush1.msra.mxu0 0.0
      %602 = vmatprep.subr.mxu0 0.0
      %603 = vmatpush1.msra.mxu0 0.0
      %604 = vmatprep.subr.mxu0 0.0
      %605 = vmatpush1.msra.mxu0 0.0
      %606 = vmatprep.subr.mxu0 0.0
      %607 = vmatpush1.msra.mxu0 0.0
      %608 = vmatprep.subr.mxu0 0.0
      %609 = vmatpush1.msra.mxu0 0.0
      %610 = vmatprep.subr.mxu0 0.0
      %611 = vmatpush1.msra.mxu0 0.0
      %612 = vmatprep.subr.mxu0 0.0
      %613 = vmatpush1.msra.mxu0 0.0
      %614 = vmatprep.subr.mxu0 0.0
      %615 = vmatpush1.msra.mxu0 0.0
      %616 = vmatprep.subr.mxu0 0.0
      %617 = vmatpush1.msra.mxu0 0.0
      %618 = vmatprep.subr.mxu0 0.0
      %619 = vmatpush1.msra.mxu0 0.0
      %620 = vmatprep.subr.mxu0 0.0
      %621 = vmatpush1.msra.mxu0 0.0
      %622 = vmatprep.subr.mxu0 0.0
      %623 = vmatpush1.msra.mxu0 0.0
      %624 = vmatprep.subr.mxu0 0.0
      %625 = vmatpush1.msra.mxu0 0.0
      %626 = vmatprep.subr.mxu0 0.0
      %627 = vmatpush1.msra.mxu0 0.0
      %628 = vmatprep.subr.mxu0 0.0
      %629 = vmatpush1.msra.mxu0 0.0
      %630 = vmatprep.subr.mxu0 0.0
      %631 = vmatpush1.msra.mxu0 0.0
      %632 = vmatprep.subr.mxu0 0.0
      %633 = vmatpush1.msra.mxu0 0.0
      %634 = vmatprep.subr.mxu0 0.0
      %635 = vmatpush1.msra.mxu0 0.0
      %636 = vmatprep.subr.mxu0 0.0
      %637 = vmatpush1.msra.mxu0 0.0
      %638 = vmatprep.subr.mxu0 0.0
      %639 = vmatpush1.msra.mxu0 0.0
      %640 = vmatprep.subr.mxu0 0.0
      %641 = vmatpush1.msra.mxu0 0.0
      %642 = vmatprep.subr.mxu0 0.0
      %643 = vmatpush1.msra.mxu0 0.0
      %644 = vmatprep.subr.mxu0 0.0
      %645 = vmatpush1.msra.mxu0 0.0
      %646 = vmatprep.mubr.f32.mxu0 0.0
      %647 = vmatmul.mubr.f32.gmra.mrb[0].mxu0 %v559
      %v648 = vpop.f32.mrb[0].mxu0
      %v649 = vadd.f32 0.0, %v648
      %v650 = vpop.f32.mrb[0].mxu0
      %651 = vmatprep.mubr.f32.mxu0 0.0
      %652 = vmatmul.mubr.f32.gmra.mrb[0].mxu0 %v562
      %v653 = vpop.f32.mrb[0].mxu0
      %v654 = vadd.f32 0.0, %v653
      %v655 = vpop.f32.mrb[0].mxu0
      %656 = vmatprep.mubr.f32.mxu0 0.0
      %657 = vmatmul.mubr.f32.gmra.mrb[0].mxu0 %v565
      %v658 = vpop.f32.mrb[0].mxu0
      %v659 = vadd.f32 0.0, %v658
      %v660 = vpop.f32.mrb[0].mxu0
      %661 = vmatprep.mubr.f32.mxu0 0.0
      %662 = vmatmul.mubr.f32.gmra.mrb[0].mxu0 %v568
      %v663 = vpop.f32.mrb[0].mxu0
      %v664 = vadd.f32 0.0, %v663
      %v665 = vpop.f32.mrb[0].mxu0
      %666 = vmatprep.mubr.f32.mxu0 0.0
      %667 = vmatmul.mubr.f32.gmra.mrb[0].mxu0 %v571
      %v668 = vpop.f32.mrb[0].mxu0
      %v669 = vadd.f32 0.0, %v668
      %v670 = vpop.f32.mrb[0].mxu0
      %671 = vmatprep.mubr.f32.mxu0 0.0
      %672 = vmatmul.mubr.f32.gmra.mrb[0].mxu0 %v574
      %v673 = vpop.f32.mrb[0].mxu0
      %v674 = vadd.f32 0.0, %v673
      %v675 = vpop.f32.mrb[0].mxu0
      %676 = vmatprep.mubr.f32.mxu0 0.0
      %677 = vmatmul.mubr.f32.gmra.mrb[0].mxu0 %v577
      %v678 = vpop.f32.mrb[0].mxu0
      %v679 = vadd.f32 0.0, %v678
      %v680 = vpop.f32.mrb[0].mxu0
      %681 = vmatprep.mubr.f32.mxu0 0.0
      %682 = vmatmul.mubr.f32.gmra.mrb[0].mxu0 %v580
      %v683 = vpop.f32.mrb[0].mxu0
      %v684 = vadd.f32 0.0, %v683
      %v685 = vpop.f32.mrb[0].mxu0
      %686 = vdwg.mxu0
      %v687 = vmax.f32 %v649, 1e-30
      %v688 = vmax.f32 %v654, 1e-30
      %v689 = vmax.f32 %v659, 1e-30
      %v690 = vmax.f32 %v664, 1e-30
      %v691 = vmax.f32 %v669, 1e-30
      %v692 = vmax.f32 %v674, 1e-30
      %v693 = vmax.f32 %v679, 1e-30
      %v694 = vmax.f32 %v684, 1e-30
      %v695 = vrcp.pop %v687
      %v696 = vrcp.pop %v688
      %v697 = vrcp.pop %v689
      %v698 = vrcp.pop %v690
      %v699 = vrcp.pop %v691
      %v700 = vrcp.pop %v692
      %v701 = vrcp.pop %v693
      %v702 = vrcp.pop %v694
      %v703 = vmul.f32 %v541, %v695
      %v704 = vmul.f32 %v543, %v696
      %v705 = vmul.f32 %v545, %v697
      %v706 = vmul.f32 %v547, %v698
      %v707 = vmul.f32 %v549, %v699
      %v708 = vmul.f32 %v551, %v700
      %v709 = vmul.f32 %v553, %v701
      %v710 = vmul.f32 %v555, %v702
      %v711 = vld [vmem:[%s353] sm:$0xff]
      %v712 = vld [vmem:[%s353 + $0x8] sm:$0xff]
      %v714 = vsel %vm507, %v703, 0
      %v717 = vsel %vm507, %v704, 0
      %v720 = vsel %vm507, %v705, 0
      %v723 = vsel %vm507, %v706, 0
      %v726 = vsel %vm507, %v707, 0
      %v729 = vsel %vm507, %v708, 0
      %v732 = vsel %vm507, %v709, 0
      %v735 = vsel %vm507, %v710, 0
      %737 = vmatprep.subr.mxu0 0.0
      %738 = vmatpush1.msra.mxu0 %v711
      %739 = vmatprep.subr.mxu0 0.0
      %740 = vmatpush1.msra.mxu0 %v712
      %741 = vmatprep.subr.mxu0 0.0
      %742 = vmatpush1.msra.mxu0 0.0
      %743 = vmatprep.subr.mxu0 0.0
      %744 = vmatpush1.msra.mxu0 0.0
      %745 = vmatprep.subr.mxu0 0.0
      %746 = vmatpush1.msra.mxu0 0.0
      %747 = vmatprep.subr.mxu0 0.0
      %748 = vmatpush1.msra.mxu0 0.0
      %749 = vmatprep.subr.mxu0 0.0
      %750 = vmatpush1.msra.mxu0 0.0
      %751 = vmatprep.subr.mxu0 0.0
      %752 = vmatpush1.msra.mxu0 0.0
      %753 = vmatprep.subr.mxu0 0.0
      %754 = vmatpush1.msra.mxu0 0.0
      %755 = vmatprep.subr.mxu0 0.0
      %756 = vmatpush1.msra.mxu0 0.0
      %757 = vmatprep.subr.mxu0 0.0
      %758 = vmatpush1.msra.mxu0 0.0
      %759 = vmatprep.subr.mxu0 0.0
      %760 = vmatpush1.msra.mxu0 0.0
      %761 = vmatprep.subr.mxu0 0.0
      %762 = vmatpush1.msra.mxu0 0.0
      %763 = vmatprep.subr.mxu0 0.0
      %764 = vmatpush1.msra.mxu0 0.0
      %765 = vmatprep.subr.mxu0 0.0
      %766 = vmatpush1.msra.mxu0 0.0
      %767 = vmatprep.subr.mxu0 0.0
      %768 = vmatpush1.msra.mxu0 0.0
      %769 = vmatprep.subr.mxu0 0.0
      %770 = vmatpush1.msra.mxu0 0.0
      %771 = vmatprep.subr.mxu0 0.0
      %772 = vmatpush1.msra.mxu0 0.0
      %773 = vmatprep.subr.mxu0 0.0
      %774 = vmatpush1.msra.mxu0 0.0
      %775 = vmatprep.subr.mxu0 0.0
      %776 = vmatpush1.msra.mxu0 0.0
      %777 = vmatprep.subr.mxu0 0.0
      %778 = vmatpush1.msra.mxu0 0.0
      %779 = vmatprep.subr.mxu0 0.0
      %780 = vmatpush1.msra.mxu0 0.0
      %781 = vmatprep.subr.mxu0 0.0
      %782 = vmatpush1.msra.mxu0 0.0
      %783 = vmatprep.subr.mxu0 0.0
      %784 = vmatpush1.msra.mxu0 0.0
      %785 = vmatprep.subr.mxu0 0.0
      %786 = vmatpush1.msra.mxu0 0.0
      %787 = vmatprep.subr.mxu0 0.0
      %788 = vmatpush1.msra.mxu0 0.0
      %789 = vmatprep.subr.mxu0 0.0
      %790 = vmatpush1.msra.mxu0 0.0
      %791 = vmatprep.subr.mxu0 0.0
      %792 = vmatpush1.msra.mxu0 0.0
      %793 = vmatprep.subr.mxu0 0.0
      %794 = vmatpush1.msra.mxu0 0.0
      %795 = vmatprep.subr.mxu0 0.0
      %796 = vmatpush1.msra.mxu0 0.0
      %797 = vmatprep.subr.mxu0 0.0
      %798 = vmatpush1.msra.mxu0 0.0
      %799 = vmatprep.subr.mxu0 0.0
      %800 = vmatpush1.msra.mxu0 0.0
      %801 = vmatprep.mubr.f32.mxu0 0.0
      %802 = vmatmul.mubr.f32.gmra.mrb[0].mxu0 %v714
      %v803 = vpop.f32.mrb[0].mxu0
      %v804 = vadd.f32 0.0, %v803
      %v805 = vpop.f32.mrb[0].mxu0
      %806 = vmatprep.mubr.f32.mxu0 0.0
      %807 = vmatmul.mubr.f32.gmra.mrb[0].mxu0 %v717
      %v808 = vpop.f32.mrb[0].mxu0
      %v809 = vadd.f32 0.0, %v808
      %v810 = vpop.f32.mrb[0].mxu0
      %811 = vmatprep.mubr.f32.mxu0 0.0
      %812 = vmatmul.mubr.f32.gmra.mrb[0].mxu0 %v720
      %v813 = vpop.f32.mrb[0].mxu0
      %v814 = vadd.f32 0.0, %v813
      %v815 = vpop.f32.mrb[0].mxu0
      %816 = vmatprep.mubr.f32.mxu0 0.0
      %817 = vmatmul.mubr.f32.gmra.mrb[0].mxu0 %v723
      %v818 = vpop.f32.mrb[0].mxu0
      %v819 = vadd.f32 0.0, %v818
      %v820 = vpop.f32.mrb[0].mxu0
      %821 = vmatprep.mubr.f32.mxu0 0.0
      %822 = vmatmul.mubr.f32.gmra.mrb[0].mxu0 %v726
      %v823 = vpop.f32.mrb[0].mxu0
      %v824 = vadd.f32 0.0, %v823
      %v825 = vpop.f32.mrb[0].mxu0
      %826 = vmatprep.mubr.f32.mxu0 0.0
      %827 = vmatmul.mubr.f32.gmra.mrb[0].mxu0 %v729
      %v828 = vpop.f32.mrb[0].mxu0
      %v829 = vadd.f32 0.0, %v828
      %v830 = vpop.f32.mrb[0].mxu0
      %831 = vmatprep.mubr.f32.mxu0 0.0
      %832 = vmatmul.mubr.f32.gmra.mrb[0].mxu0 %v732
      %v833 = vpop.f32.mrb[0].mxu0
      %v834 = vadd.f32 0.0, %v833
      %v835 = vpop.f32.mrb[0].mxu0
      %836 = vmatprep.mubr.f32.mxu0 0.0
      %837 = vmatmul.mubr.f32.gmra.mrb[0].mxu0 %v735
      %v838 = vpop.f32.mrb[0].mxu0
      %v839 = vadd.f32 0.0, %v838
      %v840 = vpop.f32.mrb[0].mxu0
      %841 = vdwg.mxu0
      %v842 = vld [vmem:[%s343] sm:$0xff]
      %v843 = vld [vmem:[%s343 + $0x8] sm:$0xff]
      %v844 = vld [vmem:[%s343 + $0x10] sm:$0xff]
      %v845 = vld [vmem:[%s343 + $0x18] sm:$0xff]
      %v846 = vld [vmem:[%s343 + $0x20] sm:$0xff]
      %v847 = vld [vmem:[%s343 + $0x28] sm:$0xff]
      %v848 = vld [vmem:[%s343 + $0x30] sm:$0xff]
      %v849 = vld [vmem:[%s343 + $0x38] sm:$0xff]
      %v850 = vadd.f32 %v842, %v804
      %v851 = vadd.f32 %v843, %v809
      %v852 = vadd.f32 %v844, %v814
      %v853 = vadd.f32 %v845, %v819
      %v854 = vadd.f32 %v846, %v824
      %v855 = vadd.f32 %v847, %v829
      %v856 = vadd.f32 %v848, %v834
      %v857 = vadd.f32 %v849, %v839
      %v858 = vld [vmem:[%s5] sm:$0x1]
      %v860 = vlaneseq
      %v861 = vshrl.u32 %v860, 7
      %v862 = vsub.s32 0, %v861
      %v863 = vrot.slane %v858, %v862
      %v865 = vadd.f32 %v850, %v863
      %v866 = vadd.f32 %v851, %v863
      %v867 = vadd.f32 %v852, %v863
      %v868 = vadd.f32 %v853, %v863
      %v869 = vadd.f32 %v854, %v863
      %v870 = vadd.f32 %v855, %v863
      %v871 = vadd.f32 %v856, %v863
      %v872 = vadd.f32 %v857, %v863
      %873 = vst.msk [vmem:[%s362] sm:$0xff] %vm373, %v865
      %874 = vst.msk [vmem:[%s362 + $0x8] sm:$0xff] %vm373, %v866
      %875 = vst.msk [vmem:[%s362 + $0x10] sm:$0xff] %vm373, %v867
      %876 = vst.msk [vmem:[%s362 + $0x18] sm:$0xff] %vm373, %v868
      %877 = vst.msk [vmem:[%s362 + $0x20] sm:$0xff] %vm373, %v869
      %878 = vst.msk [vmem:[%s362 + $0x28] sm:$0xff] %vm373, %v870
      %879 = vst.msk [vmem:[%s362 + $0x30] sm:$0xff] %vm373, %v871
      %880 = vst.msk [vmem:[%s362 + $0x38] sm:$0xff] %vm373, %v872
      %s881 = smul.u32 8, %s22
      %p882 = scmp.lt.s32.totalorder %s21, 1
      %s883 = scalar_select %p882, %s21, 1
      %p884 = scmp.lt.s32.totalorder %s881, 7
      %s885 = scalar_select %p884, %s881, 7
      %s886 = smul.addr %s883, 8
      %s887 = sadd.s32 %s885, %s886
      %s888 = smul.addr %s887, 8
      %s889 = scalar_lea.vmem %s6, %s888
      // Predicated region
      $region45: #{tpu_custom_call.1} parent=43 // pred_check
        %p890 = pneg %p199
      $region46: #{tpu_custom_call.1} parent=43 // pred_check_branch
        %892 = sbr.rel (%p890) target = $region48
      $region47: #{tpu_custom_call.1} parent=43 // pred_region
        %s893 = smul.u32 8, %s22
      $region48: #{tpu_custom_call.1} parent=43 // pred_fallthru
        _
    $region44: #{tpu_custom_call.1} parent=5 // pred_fallthru
      _
    %p894 = scmp.le.s32.totalorder 2, %s12
    // Predicated region
    $region49: #{tpu_custom_call.1} parent=5 // pred_check
      %p895 = pneg %p894
    $region50: #{tpu_custom_call.1} parent=5 // pred_check_branch
      %897 = sbr.rel (%p895) target = $region52
    $region51: #{tpu_custom_call.1} parent=5 // pred_region
      %s898 = ssub.s32 %s12, 2
      // Predicated region
      $region53: #{tpu_custom_call.1} parent=51 // pred_check
        %p899 = pneg %p205
      $region54: #{tpu_custom_call.1} parent=51 // pred_check_branch
        %901 = sbr.rel (%p899) target = $region56
      $region55: #{tpu_custom_call.1} parent=51 // pred_region
        %s902 = smul.u32 8, %s24
        %p903 = scmp.lt.s32.totalorder %s23, 1
        %s904 = scalar_select %p903, %s23, 1
        %p905 = scmp.lt.s32.totalorder %s902, 7
        %s906 = scalar_select %p905, %s902, 7
        %s907 = smul.addr %s904, 8
        %s908 = sadd.s32 %s906, %s907
        %s909 = smul.addr %s908, 8
        %s910 = scalar_lea.vmem %s6, %s909
      $region56: #{tpu_custom_call.1} parent=51 // pred_fallthru
        _
    $region52: #{tpu_custom_call.1} parent=5 // pred_fallthru
      _
  $region6: #{tpu_custom_call.1} parent=0 // loop_footer
    %s16 = sadd.s32 1, %s12
  $region7: #{tpu_custom_call.1} parent=0 // loop_footer_branch
    %11 = sbr.rel target = $region3
  $region8: #{tpu_custom_call.1} parent=0 // loop_exit
    _

</llo_original>
